<compile_context>
chip_gen: v7x
topology: tpu7x:2x2x1
jax: 0.10.0
libtpu: 0.0.40
codegen_flags: <defaults>
</compile_context>

<pallas_src>
import jax
import jax.numpy as jnp
from jax.experimental import pallas as pl
from jax.experimental.pallas import tpu as pltpu


def identity1d_kernel(x_ref, w_ref, o_ref):
    # Pure VPU elementwise: (TB, F) * (1, F) -> (TB, F), broadcast over sublanes.
    o_ref[...] = x_ref[...] * w_ref[...]


def _pick_batch_tile(batch, feat, dtype_bytes):
    """Pick a batch tile so one (TB, F) tile is ~2 MiB.

    With double buffering we hold 2x input tiles + 2x output tiles, so ~8 MiB of
    streaming VMEM — comfortably under the default scoped VMEM limit on
    v5e (16 MiB), v6e (32 MiB) and v7x (32 MiB scoped / 64 MiB physical).
    """
    target_bytes = 2 * 1024 * 1024
    tb = max(1, target_bytes // max(1, feat * dtype_bytes))
    tb = min(tb, batch)
    if tb >= 8:
        tb = (tb // 8) * 8  # keep the sublane dim a multiple of 8
    return max(tb, 1)


def identity1d(x, weight, weight_mask):
    """out = x * (weight_mask * weight), broadcast over all leading dims of x."""
    orig_shape = x.shape
    feat = orig_shape[-1]

    # Flatten leading dims -> lane-dense 2D view (feature axis = TPU lanes).
    x2 = x.reshape(-1, feat)
    batch = x2.shape[0]

    # Fold mask into weight once (f32 product, single cast) -> one (1, F) stream.
    w = (weight_mask.astype(jnp.float32) * weight.astype(jnp.float32))
    w2 = w.astype(x.dtype).reshape(1, feat)

    dtype_bytes = jnp.dtype(x.dtype).itemsize
    tb = _pick_batch_tile(batch, feat, dtype_bytes)
    grid = (pl.cdiv(batch, tb),)

    out = pl.pallas_call(
        identity1d_kernel,
        out_shape=jax.ShapeDtypeStruct((batch, feat), x.dtype),
        grid=grid,
        in_specs=[
            pl.BlockSpec((tb, feat), lambda i: (i, 0)),   # x tile, streamed
            pl.BlockSpec((1, feat), lambda i: (0, 0)),    # folded weight, resident
        ],
        out_specs=pl.BlockSpec((tb, feat), lambda i: (i, 0)),
        compiler_params=pltpu.CompilerParams(
            dimension_semantics=("parallel",),            # megacore split on v7x
        ),
    )(x2, w2)

    return out.reshape(orig_shape)


if __name__ == "__main__":
    key = jax.random.PRNGKey(0)

    # Small but lane-dense demo shape: feature axis a full multiple of 128.
    batch, num_features = 16, 128

    x = jax.random.normal(key, (batch, num_features), dtype=jnp.float32)

    # Deterministic parameter init, matching Identity1d.reset_parameters():
    #   weight = ones(num_features); weight_mask buffer = ones(num_features)
    weight = jnp.ones((num_features,), dtype=jnp.float32)
    weight_mask = jnp.ones((num_features,), dtype=jnp.float32)

    out = identity1d(x, weight, weight_mask)
    out = jax.block_until_ready(out)

    # Reference check (pure JAX): input * (weight_mask * weight)
    ref = x * (weight_mask * weight)[None, :]
    assert out.shape == x.shape and out.dtype == x.dtype
    assert jnp.allclose(out, ref, atol=1e-6, rtol=1e-6)

    print("KERNEL_OK")
</pallas_src>

<mosaic_0001>
module attributes {stable_mosaic.version = 11 : i64} {
  func.func @identity1d_kernel(%arg0: i32, %arg1: memref<16x128xf32, #tpu.memory_space<vmem>>, %arg2: memref<1x128xf32, #tpu.memory_space<vmem>>, %arg3: memref<16x128xf32, #tpu.memory_space<vmem>>) attributes {dimension_semantics = [#tpu.dimension_semantics<parallel>], iteration_bounds = array<i64: 1>, scalar_prefetch = 0 : i64, scratch_operands = 0 : i64, tpu.core_type = #tpu.core_type<tc>, window_params = [{transform_indices = @transform_0, window_bounds = array<i64: 16, 128>}, {pipeline_mode = #tpu.pipeline_mode<synchronous>, transform_indices = @transform_1, window_bounds = array<i64: 1, 128>}, {transform_indices = @transform_2, window_bounds = array<i64: 16, 128>}]} {
    %c0 = arith.constant 0 : index
    %c0_0 = arith.constant 0 : index
    %0 = vector.load %arg1[%c0, %c0_0] : memref<16x128xf32, #tpu.memory_space<vmem>>, vector<16x128xf32>
    %c0_1 = arith.constant 0 : index
    %c0_2 = arith.constant 0 : index
    %1 = vector.load %arg2[%c0_1, %c0_2] : memref<1x128xf32, #tpu.memory_space<vmem>>, vector<1x128xf32>
    %2 = vector.broadcast %1 : vector<1x128xf32> to vector<16x128xf32>
    %3 = arith.mulf %0, %2 : vector<16x128xf32>
    %c0_3 = arith.constant 0 : index
    %c0_4 = arith.constant 0 : index
    %4 = vector.load %arg3[%c0_3, %c0_4] : memref<16x128xf32, #tpu.memory_space<vmem>>, vector<16x128xf32>
    tpu.vector_store %arg3[%c0_3, %c0_4], %3 {strides = array<i32>} : memref<16x128xf32, #tpu.memory_space<vmem>>, vector<16x128xf32>,
    return
  }
  func.func @transform_0(%arg0: i32) -> (i32, i32) {
    %c0_i32 = arith.constant 0 : i32
    %c0_i32_0 = arith.constant 0 : i32
    return %arg0, %c0_i32 : i32, i32
  }
  func.func @transform_1(%arg0: i32) -> (i32, i32) {
    %c0_i32 = arith.constant 0 : i32
    %c0_i32_0 = arith.constant 0 : i32
    %c0_i32_1 = arith.constant 0 : i32
    return %c0_i32, %c0_i32_0 : i32, i32
  }
  func.func @transform_2(%arg0: i32) -> (i32, i32) {
    %c0_i32 = arith.constant 0 : i32
    %c0_i32_0 = arith.constant 0 : i32
    return %arg0, %c0_i32 : i32, i32
  }
}

</mosaic_0001>

<llo_original>
// kernel: tpu_custom_call.1
$region0: #{tpu_custom_call.1}
  #allocation0 [shape = 'u32[]', space=smem, size = 0x4, offset = 0x4, fixed_abs, tag = 'smem constant byte address 0x4 - core index']
  #allocation1 [shape = 'u32[144,128]{1,0:T(1,128)}', space=vmem, size = 0x12000, scoped, tag = 'internal scratch']
  %s0 = inlined_call_operand.hbm [shape: f32[16,128], index: 0, kind: input, shape index: {}]
  %s1 = inlined_call_operand.vmem [shape: f32[1,128], index: 1, kind: input, shape index: {}]
  %s2 = inlined_call_operand.hbm [shape: f32[16,128], index: 2, kind: output, shape index: {}]
  %s3 = sld [smem:[#allocation0]]
  $region22: #{tpu_custom_call.1} parent=0
    _
  %s5 = ssub.s32 1, %s3
  %s6 = scalar_select 0, %s5, %s3
  $region1: #{tpu_custom_call.1} parent=0
    #allocation2 [shape = 'u8[8192]{0}', space=vmem, size = 0x2000, scoped, tag = 'input window, operand 0, single buffered']
    #allocation3 [shape = 's32[1]{0}', space=sflag, size = 0x4, scoped, tag = 'scoped memory for tpu_custom_call.1']
    #allocation4 [shape = 's32[1]{0}', space=sflag, size = 0x4, scoped, tag = 'scoped memory for tpu_custom_call.1']
    #allocation5 [shape = 'u8[8192]{0}', space=vmem, size = 0x2000, scoped, tag = 'output window, operand 0, single buffered']
    %7 = vsyncpa [#allocation3], 0
    %8 = vsyncpa [#allocation4], 0
    // Predicated region
    $region2: #{tpu_custom_call.1} parent=1 // pred_check
      _
    $region3: #{tpu_custom_call.1} parent=1 // pred_check_branch
      %10 = sbr.rel (0) target = $region5
    $region4: #{tpu_custom_call.1} parent=1 // pred_region
      %s12 = ssub.s32 256, 256
      %13 = vsyncadd [#allocation3], %s12
      %s14 = sshll.u32 [#allocation2], 4
      %s15 = int_to_ptr.vmem [resolvable:$true] %s14
      %20 = dma.hbm_to_vmem [thread:$0]  %s0, 256, %s15, [#allocation3], 128, 128, 8
    $region5: #{tpu_custom_call.1} parent=1 // pred_fallthru
      _
    // Predicated region
    $region6: #{tpu_custom_call.1} parent=1 // pred_check
      _
    $region7: #{tpu_custom_call.1} parent=1 // pred_check_branch
      %22 = sbr.rel (0) target = $region9
    $region8: #{tpu_custom_call.1} parent=1 // pred_region
      _
    $region9: #{tpu_custom_call.1} parent=1 // pred_fallthru
      _
    // Predicated region
    $region10: #{tpu_custom_call.1} parent=1 // pred_check
      _
    $region11: #{tpu_custom_call.1} parent=1 // pred_check_branch
      %24 = sbr.rel (0) target = $region13
    $region12: #{tpu_custom_call.1} parent=1 // pred_region
      %25 = dma.done [#allocation3], 256
    $region13: #{tpu_custom_call.1} parent=1 // pred_fallthru
      _
    %v26 = vld [vmem:[#allocation2] sm:$0xff]
    %v27 = vld [vmem:[#allocation2 + $0x8] sm:$0xff]
    %v28 = vld [vmem:[%s1] sm:$0x1]
    %v30 = vlaneseq
    %v31 = vshrl.u32 %v30, 7
    %v32 = vsub.s32 0, %v31
    %v33 = vrot.slane %v28, %v32
    %v35 = vmul.f32 %v26, %v33
    %v36 = vmul.f32 %v27, %v33
    %37 = vst [vmem:[#allocation5] sm:$0xff] %v35
    %38 = vst [vmem:[#allocation5 + $0x8] sm:$0xff] %v36
    // Predicated region
    $region14: #{tpu_custom_call.1} parent=1 // pred_check
      _
    $region15: #{tpu_custom_call.1} parent=1 // pred_check_branch
      %40 = sbr.rel (0) target = $region17
    $region16: #{tpu_custom_call.1} parent=1 // pred_region
      %s42 = ssub.s32 256, 256
      %43 = vsyncadd [#allocation4], %s42
      %s44 = sshll.u32 [#allocation5], 4
      %s45 = int_to_ptr.vmem [resolvable:$true] %s44
      %50 = dma.vmem_to_hbm [thread:$0]  %s45, 256, %s2, [#allocation4], 128, 128, 8
    $region17: #{tpu_custom_call.1} parent=1 // pred_fallthru
      _
    // Predicated region
    $region18: #{tpu_custom_call.1} parent=1 // pred_check
      _
    $region19: #{tpu_custom_call.1} parent=1 // pred_check_branch
      %52 = sbr.rel (0) target = $region21
    $region20: #{tpu_custom_call.1} parent=1 // pred_region
      %53 = dma.done [#allocation4], 256
    $region21: #{tpu_custom_call.1} parent=1 // pred_fallthru
      _
    %54 = vsyncpa [#allocation3], 1
    %55 = vsyncpa [#allocation4], 1

</llo_original>
